<compile_context>
chip_gen: v7x
topology: tpu7x:2x2x1
jax: 0.10.0
libtpu: 0.0.40
codegen_flags: <defaults>
</compile_context>

<pallas_src>
import functools

import jax
import jax.numpy as jnp
from jax.experimental import pallas as pl
from jax.experimental.pallas import tpu as pltpu

_LANE = 128


def _tpu_defaults():
    """(block_rows, num_splits) per TPU generation."""
    try:
        kind = jax.devices()[0].device_kind.lower()
    except Exception:  # pragma: no cover - defensive
        kind = ""
    if "v7" in kind:
        return 8192, 2      # 4 MiB/block/input; 2 TCs -> split the rows
    if "v6" in kind:
        return 4096, 1      # 2 MiB/block/input, ~8 MiB resident
    return 2048, 1          # v5e (16 MiB scoped default) and unknown chips


def _focal_loss_kernel(pred_ref, mask_ref, out_ref, acc_ref, *,
                       gamma, alpha, acc_rows, steps):
    i = pl.program_id(1)

    @pl.when(i == 0)
    def _():
        acc_ref[...] = jnp.zeros_like(acc_ref)

    x = pred_ref[...].astype(jnp.float32)
    m = mask_ref[...].astype(jnp.float32)

    # Stable log-sigmoid: s = softplus(-x) = max(-x, 0) + log(1 + exp(-|x|)).
    # 3 EUP transcendentals total (exp, log, exp) vs 4 for sigmoid + 2 logs.
    e = jnp.exp(-jnp.abs(x))
    s = jnp.maximum(-x, 0.0) + jnp.log(1.0 + e)
    log_p = -s                # log(sigmoid(x))
    log_1mp = -(x + s)        # log(1 - sigmoid(x))
    p = jnp.exp(log_p)        # sigmoid(x) in (0, 1], never overflows
    one_m_p = 1.0 - p

    if float(gamma) == 2.0:
        # Two VPU multiplies instead of exp(gamma*log(.)) on the single EUP slot.
        w_pos = one_m_p * one_m_p
        w_neg = p * p
    else:
        w_pos = jnp.power(one_m_p, jnp.float32(gamma))
        w_neg = jnp.power(p, jnp.float32(gamma))

    # loss = -[mask*A + (1-mask)*B] = -(B + mask*(A - B))
    a = alpha * w_pos * log_p
    b = (1.0 - alpha) * w_neg * log_1mp
    loss = -(b + m * (a - b))

    rows = loss.shape[0]
    groups = rows // acc_rows
    if groups == 1:
        partial = loss
    else:
        # Leading-axis reduce: pure VPU vreg adds, no XLU traffic.
        partial = loss.reshape(groups, acc_rows, _LANE).sum(axis=0)
    acc_ref[...] += partial

    @pl.when(i == steps - 1)
    def _():
        out_ref[0, 0] = jnp.sum(acc_ref[...])


def _loss_sum_jnp(pred, mask, gamma, alpha):
    """Reference-formula loss *sum* over a (small) ragged tail."""
    x = pred.astype(jnp.float32)
    m = mask.astype(jnp.float32)
    p = jax.nn.sigmoid(x)
    w_pos = (1.0 - p) ** gamma
    w_neg = p ** gamma
    lp = -alpha * m * w_pos * jnp.log(p + 1e-12)
    ln = -(1.0 - alpha) * (1.0 - m) * w_neg * jnp.log(1.0 - p + 1e-12)
    return jnp.sum(lp) + jnp.sum(ln)


def focal_loss(pred, mask, gamma=2.0, alpha=0.25, block_rows=None,
               num_splits=None):
    """pred, mask: [B, 1, H, W] (any float/bool dtype). Returns scalar f32 loss."""
    assert pred.shape == mask.shape, 'pred and mask should have the same shape.'
    n = pred.size

    def_rows, def_splits = _tpu_defaults()
    if block_rows is None:
        block_rows = def_rows
    if num_splits is None:
        num_splits = def_splits

    pred_f = pred.reshape(-1)   # contiguous reshape: free (bitcast)
    mask_f = mask.reshape(-1)

    rows_full = n // _LANE
    kernel_sum = jnp.float32(0.0)
    covered = 0

    if rows_full > 0:
        # Sublane quantum: 8 for 4-byte, 16 for 2-byte, 32 for 1-byte inputs.
        itemsize = min(jnp.dtype(pred.dtype).itemsize, jnp.dtype(mask.dtype).itemsize)
        q = {1: 32, 2: 16}.get(itemsize, 8)

        if rows_full < q:
            # Single block equal to the full (tiny) array: always legal.
            block_rows_eff = rows_full
        else:
            block_rows_eff = min(int(block_rows), (rows_full // q) * q)
            block_rows_eff = max(q, (block_rows_eff // q) * q)
        acc_rows = 8 if block_rows_eff % 8 == 0 else block_rows_eff

        total_blocks = rows_full // block_rows_eff
        ns = num_splits if (num_splits > 1 and total_blocks >= num_splits
                            and total_blocks % num_splits == 0) else 1
        steps = total_blocks // ns
        covered = total_blocks * block_rows_eff * _LANE

        # Zero-copy view when numel is 128-aligned (slice of the full extent is
        # a no-op); for unaligned numel this prefix slice copies once.
        p2 = pred_f[:rows_full * _LANE].reshape(rows_full, _LANE)
        m2 = mask_f[:rows_full * _LANE].reshape(rows_full, _LANE)

        kernel = functools.partial(
            _focal_loss_kernel, gamma=float(gamma), alpha=float(alpha),
            acc_rows=acc_rows, steps=steps)
        in_map = lambda c, i: (c * steps + i, 0)

        partials = pl.pallas_call(
            kernel,
            out_shape=jax.ShapeDtypeStruct((ns, 1), jnp.float32),
            grid=(ns, steps),
            in_specs=[
                pl.BlockSpec((block_rows_eff, _LANE), in_map),
                pl.BlockSpec((block_rows_eff, _LANE), in_map),
            ],
            out_specs=pl.BlockSpec((1, 1), lambda c, i: (c, 0),
                                   memory_space=pltpu.SMEM),
            scratch_shapes=[pltpu.VMEM((acc_rows, _LANE), jnp.float32)],
            compiler_params=pltpu.CompilerParams(
                dimension_semantics=("parallel", "arbitrary")),
        )(p2, m2)
        kernel_sum = jnp.sum(partials)

    if covered < n:
        # Ragged remainder (< one block of rows, plus any sub-128 tail): plain jnp.
        tail_sum = _loss_sum_jnp(pred_f[covered:], mask_f[covered:], gamma, alpha)
    else:
        tail_sum = jnp.float32(0.0)

    # num_pos + num_neg == numel, so the denominator is just numel + 1e-12.
    return (kernel_sum + tail_sum) / (jnp.float32(n) + 1e-12)


def _focal_loss_ref(pred, mask, gamma=2.0, alpha=0.25):
    pred = pred.astype(jnp.float32)
    mask = mask.astype(jnp.float32)
    p = jax.nn.sigmoid(pred)
    num_pos = jnp.sum(mask)
    num_neg = mask.size - num_pos
    w_pos = (1.0 - p) ** gamma
    w_neg = p ** gamma
    loss_pos = -alpha * mask * w_pos * jnp.log(p + 1e-12)
    loss_neg = -(1.0 - alpha) * (1.0 - mask) * w_neg * jnp.log(1.0 - p + 1e-12)
    return (jnp.sum(loss_pos) + jnp.sum(loss_neg)) / (num_pos + num_neg + 1e-12)


if __name__ == "__main__":
    # FocalLoss has no learnable parameters (gamma=2.0, alpha=0.25 constants).
    key = jax.random.PRNGKey(0)
    k1, k2, k3, k4, k5, k6 = jax.random.split(key, 6)

    # Primary small shape consistent with the module's [B, 1, H, W] inputs.
    B, C, H, W = 2, 1, 16, 16
    pred = jax.random.normal(k1, (B, C, H, W), dtype=jnp.float32)
    mask = (jax.random.uniform(k2, (B, C, H, W)) > 0.5).astype(jnp.float32)
    loss = focal_loss(pred, mask)
    jax.block_until_ready(loss)
    ref = _focal_loss_ref(pred, mask)
    assert jnp.allclose(loss, ref, rtol=1e-5, atol=1e-6), (loss, ref)

    # Multi-block grid (several accumulation steps) + leftover-rows tail.
    pred2 = jax.random.normal(k3, (2, 1, 40, 40), dtype=jnp.float32)      # n=3200
    mask2 = (jax.random.uniform(k4, (2, 1, 40, 40)) > 0.7).astype(jnp.float32)
    loss2 = focal_loss(pred2, mask2, block_rows=8)
    jax.block_until_ready(loss2)
    ref2 = _focal_loss_ref(pred2, mask2)
    assert jnp.allclose(loss2, ref2, rtol=1e-5, atol=1e-6), (loss2, ref2)

    # Non-128-multiple numel: exercises the ragged-tail wrapper path.
    pred3 = jax.random.normal(k5, (2, 1, 15, 15), dtype=jnp.float32)      # n=450
    mask3 = (jax.random.uniform(k6, (2, 1, 15, 15)) > 0.5).astype(jnp.float32)
    loss3 = focal_loss(pred3, mask3)
    jax.block_until_ready(loss3)
    ref3 = _focal_loss_ref(pred3, mask3)
    assert jnp.allclose(loss3, ref3, rtol=1e-5, atol=1e-6), (loss3, ref3)

    print("KERNEL_OK")
</pallas_src>

<mosaic_0001>
module attributes {stable_mosaic.version = 11 : i64} {
  func.func @_focal_loss_kernel(%arg0: i32, %arg1: i32, %arg2: memref<4x128xf32, #tpu.memory_space<vmem>>, %arg3: memref<4x128xf32, #tpu.memory_space<vmem>>, %arg4: memref<1x1xf32, #tpu.memory_space<smem>>, %arg5: memref<4x128xf32, #tpu.memory_space<vmem>>) attributes {dimension_semantics = [#tpu.dimension_semantics<parallel>, #tpu.dimension_semantics<arbitrary>], iteration_bounds = array<i64: 1, 1>, scalar_prefetch = 0 : i64, scratch_operands = 1 : i64, tpu.core_type = #tpu.core_type<tc>, window_params = [{transform_indices = @transform_0, window_bounds = array<i64: 4, 128>}, {transform_indices = @transform_1, window_bounds = array<i64: 4, 128>}, {transform_indices = @transform_2, window_bounds = array<i64: 1, 1>}]} {
    %c0_i32 = arith.constant 0 : i32
    %0 = arith.cmpi eq, %arg1, %c0_i32 : i32
    %1 = arith.extui %0 : i1 to i32
    %c0_i32_0 = arith.constant 0 : i32
    %2 = arith.cmpi ne, %1, %c0_i32_0 : i32
    scf.if %2 {
      %cst_19 = arith.constant 0.000000e+00 : f32
      %44 = vector.broadcast %cst_19 : f32 to vector<4x128xf32>
      %c0_20 = arith.constant 0 : index
      %c0_21 = arith.constant 0 : index
      %45 = vector.load %arg5[%c0_20, %c0_21] : memref<4x128xf32, #tpu.memory_space<vmem>>, vector<4x128xf32>
      tpu.vector_store %arg5[%c0_20, %c0_21], %44 {strides = array<i32>} : memref<4x128xf32, #tpu.memory_space<vmem>>, vector<4x128xf32>,
    } else {
    }
    %c0 = arith.constant 0 : index
    %c0_1 = arith.constant 0 : index
    %3 = vector.load %arg2[%c0, %c0_1] : memref<4x128xf32, #tpu.memory_space<vmem>>, vector<4x128xf32>
    %c0_2 = arith.constant 0 : index
    %c0_3 = arith.constant 0 : index
    %4 = vector.load %arg3[%c0_2, %c0_3] : memref<4x128xf32, #tpu.memory_space<vmem>>, vector<4x128xf32>
    %5 = math.absf %3 : vector<4x128xf32>
    %cst = arith.constant 0.000000e+00 : f32
    %6 = vector.broadcast %cst : f32 to vector<4x128xf32>
    %7 = arith.subf %6, %5 : vector<4x128xf32>
    %8 = math.exp %7 : vector<4x128xf32>
    %cst_4 = arith.constant 0.000000e+00 : f32
    %9 = vector.broadcast %cst_4 : f32 to vector<4x128xf32>
    %10 = arith.subf %9, %3 : vector<4x128xf32>
    %cst_5 = arith.constant 0.000000e+00 : f32
    %11 = vector.broadcast %cst_5 : f32 to vector<4x128xf32>
    %12 = arith.maximumf %10, %11 : vector<4x128xf32>
    %cst_6 = arith.constant 1.000000e+00 : f32
    %13 = vector.broadcast %cst_6 : f32 to vector<4x128xf32>
    %14 = arith.addf %13, %8 : vector<4x128xf32>
    %15 = math.log %14 : vector<4x128xf32>
    %16 = arith.addf %12, %15 : vector<4x128xf32>
    %cst_7 = arith.constant 0.000000e+00 : f32
    %17 = vector.broadcast %cst_7 : f32 to vector<4x128xf32>
    %18 = arith.subf %17, %16 : vector<4x128xf32>
    %19 = arith.addf %3, %16 : vector<4x128xf32>
    %cst_8 = arith.constant 0.000000e+00 : f32
    %20 = vector.broadcast %cst_8 : f32 to vector<4x128xf32>
    %21 = arith.subf %20, %19 : vector<4x128xf32>
    %22 = math.exp %18 : vector<4x128xf32>
    %cst_9 = arith.constant 1.000000e+00 : f32
    %23 = vector.broadcast %cst_9 : f32 to vector<4x128xf32>
    %24 = arith.subf %23, %22 : vector<4x128xf32>
    %25 = arith.mulf %24, %24 : vector<4x128xf32>
    %26 = arith.mulf %22, %22 : vector<4x128xf32>
    %cst_10 = arith.constant 2.500000e-01 : f32
    %27 = vector.broadcast %cst_10 : f32 to vector<4x128xf32>
    %28 = arith.mulf %27, %25 : vector<4x128xf32>
    %29 = arith.mulf %28, %18 : vector<4x128xf32>
    %cst_11 = arith.constant 7.500000e-01 : f32
    %30 = vector.broadcast %cst_11 : f32 to vector<4x128xf32>
    %31 = arith.mulf %30, %26 : vector<4x128xf32>
    %32 = arith.mulf %31, %21 : vector<4x128xf32>
    %33 = arith.subf %29, %32 : vector<4x128xf32>
    %34 = arith.mulf %4, %33 : vector<4x128xf32>
    %35 = arith.addf %32, %34 : vector<4x128xf32>
    %cst_12 = arith.constant 0.000000e+00 : f32
    %36 = vector.broadcast %cst_12 : f32 to vector<4x128xf32>
    %37 = arith.subf %36, %35 : vector<4x128xf32>
    %c0_13 = arith.constant 0 : index
    %c0_14 = arith.constant 0 : index
    %38 = vector.load %arg5[%c0_13, %c0_14] : memref<4x128xf32, #tpu.memory_space<vmem>>, vector<4x128xf32>
    %39 = arith.addf %38, %37 : vector<4x128xf32>
    %c0_15 = arith.constant 0 : index
    %c0_16 = arith.constant 0 : index
    %40 = vector.load %arg5[%c0_15, %c0_16] : memref<4x128xf32, #tpu.memory_space<vmem>>, vector<4x128xf32>
    tpu.vector_store %arg5[%c0_15, %c0_16], %39 {strides = array<i32>} : memref<4x128xf32, #tpu.memory_space<vmem>>, vector<4x128xf32>,
    %c0_i32_17 = arith.constant 0 : i32
    %41 = arith.cmpi eq, %arg1, %c0_i32_17 : i32
    %42 = arith.extui %41 : i1 to i32
    %c0_i32_18 = arith.constant 0 : i32
    %43 = arith.cmpi ne, %42, %c0_i32_18 : i32
    scf.if %43 {
      %c0_19 = arith.constant 0 : index
      %c0_20 = arith.constant 0 : index
      %44 = vector.load %arg5[%c0_19, %c0_20] : memref<4x128xf32, #tpu.memory_space<vmem>>, vector<4x128xf32>
      %45 = vector.shape_cast %44 : vector<4x128xf32> to vector<1x4x128xf32>
      %cst_21 = arith.constant dense<0.000000e+00> : vector<1xf32>
      %46 = vector.multi_reduction <add>, %45, %cst_21 [1, 2] : vector<1x4x128xf32> to vector<1xf32>
      %47 = vector.shape_cast %46 : vector<1xf32> to vector<1x1x1xf32>
      %48 = vector.extract %47[0, 0, 0] : f32 from vector<1x1x1xf32>
      %c0_22 = arith.constant 0 : index
      %c0_23 = arith.constant 0 : index
      %49 = memref.load %arg4[%c0_22, %c0_23] : memref<1x1xf32, #tpu.memory_space<smem>>
      memref.store %48, %arg4[%c0_22, %c0_23] : memref<1x1xf32, #tpu.memory_space<smem>>
    } else {
    }
    return
  }
  func.func @transform_0(%arg0: i32, %arg1: i32) -> (i32, i32) {
    %c1_i32 = arith.constant 1 : i32
    %0 = arith.muli %arg0, %c1_i32 : i32
    %1 = arith.addi %0, %arg1 : i32
    %c0_i32 = arith.constant 0 : i32
    %c0_i32_0 = arith.constant 0 : i32
    return %1, %c0_i32 : i32, i32
  }
  func.func @transform_1(%arg0: i32, %arg1: i32) -> (i32, i32) {
    %c1_i32 = arith.constant 1 : i32
    %0 = arith.muli %arg0, %c1_i32 : i32
    %1 = arith.addi %0, %arg1 : i32
    %c0_i32 = arith.constant 0 : i32
    %c0_i32_0 = arith.constant 0 : i32
    return %1, %c0_i32 : i32, i32
  }
  func.func @transform_2(%arg0: i32, %arg1: i32) -> (i32, i32) {
    %c0_i32 = arith.constant 0 : i32
    %c0_i32_0 = arith.constant 0 : i32
    return %arg0, %c0_i32 : i32, i32
  }
}

</mosaic_0001>

<llo_original>
// kernel: tpu_custom_call.1
$region0: #{tpu_custom_call.1}
  #allocation0 [shape = 'u32[]', space=smem, size = 0x4, offset = 0x4, fixed_abs, tag = 'smem constant byte address 0x4 - core index']
  #allocation1 [shape = 'u32[144,128]{1,0:T(1,128)}', space=vmem, size = 0x12000, scoped, tag = 'internal scratch']
  #allocation2 [shape = 'f32[4,128]{1,0:T(4,128)}', space=vmem, size = 0x800, scoped, tag = 'scratch operand']
  %s0 = inlined_call_operand.hbm [shape: f32[4,128], index: 0, kind: input, shape index: {}]
  %s1 = inlined_call_operand.hbm [shape: f32[4,128], index: 1, kind: input, shape index: {}]
  %s2 = inlined_call_operand.hbm [shape: f32[1,1], index: 2, kind: output, shape index: {}]
  %s3 = sld [smem:[#allocation0]]
  $region34: #{tpu_custom_call.1} parent=0
    _
  %s5 = ssub.s32 1, %s3
  %s6 = scalar_select 0, %s5, %s3
  $region1: #{tpu_custom_call.1} parent=0
    #allocation3 [shape = 'u8[2048]{0}', space=vmem, size = 0x800, scoped, tag = 'input window, operand 0, single buffered']
    #allocation4 [shape = 's32[1]{0}', space=sflag, size = 0x4, scoped, tag = 'scoped memory for tpu_custom_call.1']
    #allocation5 [shape = 's32[1]{0}', space=sflag, size = 0x4, scoped, tag = 'scoped memory for tpu_custom_call.1']
    #allocation6 [shape = 'u8[2048]{0}', space=vmem, size = 0x800, scoped, tag = 'input window, operand 1, single buffered']
    #allocation7 [shape = 's32[1]{0}', space=sflag, size = 0x4, scoped, tag = 'scoped memory for tpu_custom_call.1']
    #allocation8 [shape = 'u8[512]{0}', space=smem, size = 0x200, scoped, tag = 'output window, operand 0, single buffered']
    %7 = vsyncpa [#allocation4], 0
    %8 = vsyncpa [#allocation7], 0
    %9 = vsyncpa [#allocation5], 0
    // Predicated region
    $region2: #{tpu_custom_call.1} parent=1 // pred_check
      _
    $region3: #{tpu_custom_call.1} parent=1 // pred_check_branch
      %11 = sbr.rel (0) target = $region5
    $region4: #{tpu_custom_call.1} parent=1 // pred_region
      %s12 = sadd.s32 0, 0
      %s14 = ssub.s32 64, 64
      %15 = vsyncadd [#allocation4], %s14
      %s16 = smul.addr %s12, 64
      %s17 = scalar_lea.hbm %s0, %s16
      %s19 = sshll.u32 [#allocation3], 4
      %s20 = int_to_ptr.vmem [resolvable:$true] %s19
      %22 = dma.hbm_to_vmem [thread:$0]  %s17, 64, %s20, [#allocation4]
    $region5: #{tpu_custom_call.1} parent=1 // pred_fallthru
      _
    // Predicated region
    $region6: #{tpu_custom_call.1} parent=1 // pred_check
      _
    $region7: #{tpu_custom_call.1} parent=1 // pred_check_branch
      %24 = sbr.rel (0) target = $region9
    $region8: #{tpu_custom_call.1} parent=1 // pred_region
      %s25 = sadd.s32 0, 0
      %s27 = ssub.s32 64, 64
      %28 = vsyncadd [#allocation7], %s27
      %s29 = smul.addr %s25, 64
      %s30 = scalar_lea.hbm %s1, %s29
      %s32 = sshll.u32 [#allocation6], 4
      %s33 = int_to_ptr.vmem [resolvable:$true] %s32
      %35 = dma.hbm_to_vmem [thread:$0]  %s30, 64, %s33, [#allocation7]
    $region9: #{tpu_custom_call.1} parent=1 // pred_fallthru
      _
    // Predicated region
    $region10: #{tpu_custom_call.1} parent=1 // pred_check
      _
    $region11: #{tpu_custom_call.1} parent=1 // pred_check_branch
      %37 = sbr.rel (0) target = $region13
    $region12: #{tpu_custom_call.1} parent=1 // pred_region
      %38 = dma.done [#allocation4], 64
    $region13: #{tpu_custom_call.1} parent=1 // pred_fallthru
      _
    // Predicated region
    $region14: #{tpu_custom_call.1} parent=1 // pred_check
      _
    $region15: #{tpu_custom_call.1} parent=1 // pred_check_branch
      %40 = sbr.rel (0) target = $region17
    $region16: #{tpu_custom_call.1} parent=1 // pred_region
      %41 = dma.done [#allocation7], 64
    $region17: #{tpu_custom_call.1} parent=1 // pred_fallthru
      _
    %s42 = sadd.s32 0, 0
    %s43 = sadd.s32 0, 0
    %p44 = scmp.eq.s32.totalorder 0, 0
    // Predicated region
    $region18: #{tpu_custom_call.1} parent=1 // pred_check
      %p45 = pneg %p44
    $region19: #{tpu_custom_call.1} parent=1 // pred_check_branch
      %47 = sbr.rel (%p45) target = $region21
    $region20: #{tpu_custom_call.1} parent=1 // pred_region
      %48 = vst [vmem:[#allocation2] sm:$0xf] 0.0
    $region21: #{tpu_custom_call.1} parent=1 // pred_fallthru
      _
    %v49 = vld [vmem:[#allocation3] sm:$0xf]
    %v50 = vld [vmem:[#allocation6] sm:$0xf]
    %v51 = vand.u32 2147483647, %v49
    %v52 = vsub.f32 0.0, %v51
    %v53 = vmul.f32 %v52, 1.442695
    %v54 = vpow.pop %v53
    %v55 = vsub.f32 0.0, %v49
    %v56 = vmax.f32 %v55, 0.0
    %v57 = vadd.f32 %v54, 1.0
    %v58 = vlog2.pop %v57
    %v59 = vmul.f32 %v58, 0.6931472
    %v60 = vadd.f32 %v56, %v59
    %v61 = vsub.f32 0.0, %v60
    %v62 = vadd.f32 %v49, %v60
    %v63 = vsub.f32 0.0, %v62
    %v64 = vmul.f32 %v61, 1.442695
    %v65 = vpow.pop %v64
    %v66 = vsub.f32 1.0, %v65
    %v67 = vmul.f32 %v66, %v66
    %v68 = vmul.f32 %v65, %v65
    %v69 = vmul.f32 %v67, 0.25
    %v70 = vmul.f32 %v69, %v61
    %v71 = vmul.f32 %v68, 0.75
    %v72 = vmul.f32 %v71, %v63
    %v73 = vsub.f32 %v70, %v72
    %v74 = vmul.f32 %v50, %v73
    %v75 = vadd.f32 %v72, %v74
    %v76 = vsub.f32 0.0, %v75
    %v77 = vld [vmem:[#allocation2] sm:$0xf]
    %v78 = vadd.f32 %v77, %v76
    %79 = vst [vmem:[#allocation2] sm:$0xf] %v78
    // Predicated region
    $region22: #{tpu_custom_call.1} parent=1 // pred_check
      %p80 = pneg %p44
    $region23: #{tpu_custom_call.1} parent=1 // pred_check_branch
      %82 = sbr.rel (%p80) target = $region25
    $region24: #{tpu_custom_call.1} parent=1 // pred_region
      %v83 = vld [vmem:[#allocation2] sm:$0xf]
      %vm84 = vcmask 1043456
      %v85 = vsel %vm84, %v83, 0.0
      %86 = vadd.xlane.f32.xlu0 %v85
      %v87 = vpop.xlane.xlu0 %86
      %v88 = vrot.slane %v87, 4
      %v89 = vadd.f32 %v87, %v88
      %v90 = vrot.slane %v89, 2
      %v91 = vadd.f32 %v89, %v90
      %v92 = vrot.slane %v91, 1
      %v93 = vadd.f32 %v91, %v92
      %s94 = vtos %v93
      %s95 = scalar_lea.smem [#allocation8], 0
      %96 = sst [smem:[%s95]] %s94
    $region25: #{tpu_custom_call.1} parent=1 // pred_fallthru
      _
    // Predicated region
    $region26: #{tpu_custom_call.1} parent=1 // pred_check
      _
    $region27: #{tpu_custom_call.1} parent=1 // pred_check_branch
      %98 = sbr.rel (0) target = $region29
    $region28: #{tpu_custom_call.1} parent=1 // pred_region
      %s100 = ssub.s32 16, 16
      %101 = vsyncadd [#allocation5], %s100
      %104 = dma.smem_to_hbm [#allocation8], 16, %s2, [#allocation5]
    $region29: #{tpu_custom_call.1} parent=1 // pred_fallthru
      _
    // Predicated region
    $region30: #{tpu_custom_call.1} parent=1 // pred_check
      _
    $region31: #{tpu_custom_call.1} parent=1 // pred_check_branch
      %106 = sbr.rel (0) target = $region33
    $region32: #{tpu_custom_call.1} parent=1 // pred_region
      %107 = dma.done [#allocation5], 16
    $region33: #{tpu_custom_call.1} parent=1 // pred_fallthru
      _
    %108 = sfence
    %109 = vsyncpa [#allocation4], 1
    %110 = vsyncpa [#allocation7], 1
    %111 = vsyncpa [#allocation5], 1

</llo_original>
